<compile_context>
chip_gen: v5e
topology: v5e:2x2
jax: 0.10.0
libtpu: 0.0.40
codegen_flags: <defaults>
</compile_context>

<pallas_src>
import functools

import jax
import jax.numpy as jnp
from jax.experimental import pallas as pl
from jax.experimental.pallas import tpu as pltpu


def _round_up(x, m):
    return ((x + m - 1) // m) * m


# ----------------------------------------------------------------------------
# Kernels
# ----------------------------------------------------------------------------
def _linear_resident_kernel(x_ref, wt_ref, b_ref, o_ref):
    """W^T fully resident in VMEM: out_tile = x_tile @ W^T + b. No K axis."""
    o_ref[...] = (
        jnp.dot(x_ref[...], wt_ref[...], preferred_element_type=jnp.float32)
        + b_ref[...]
    ).astype(o_ref.dtype)


def _linear_ktiled_kernel(x_ref, wt_ref, b_ref, o_ref):
    """K-tiled fallback. Output block (f32) is resident across k; bias folded
    into the k == 0 init, partial products accumulated directly into o_ref."""
    @pl.when(pl.program_id(2) == 0)
    def _():
        o_ref[...] = jnp.broadcast_to(b_ref[...], o_ref.shape).astype(o_ref.dtype)

    o_ref[...] += jnp.dot(
        x_ref[...], wt_ref[...], preferred_element_type=jnp.float32
    ).astype(o_ref.dtype)


# ----------------------------------------------------------------------------
# One-time parameter preparation (hoisted out of the per-call hot path)
# ----------------------------------------------------------------------------
def prepare_linear_params(w, b):
    """w: (N, K) PyTorch Linear layout, b: (N,).

    Returns (wt, bp, n_out) with wt = W^T padded to (K, Np), bp = (1, Np),
    Np a multiple of 128 so output stores are lane-dense (unmasked vst).
    """
    n_out, k = w.shape
    n_pad = _round_up(n_out, 128)
    wt = jnp.zeros((k, n_pad), w.dtype).at[:, :n_out].set(w.T)
    bp = jnp.zeros((1, n_pad), b.dtype).at[0, :n_out].set(b)
    return wt, bp, n_out


def _vmem_limit_bytes(tm, tn, k, x_bytes, w_bytes, o_bytes):
    est = (
        2 * tm * k * x_bytes          # double-buffered x tiles
        + 2 * k * tn * w_bytes        # weight buffers
        + 2 * tm * tn * max(o_bytes, 4)
        + 2 * tn * 4                  # bias
        + (2 << 20)                   # slack for compiler-internal scratch
    )
    return int(min(max(est, 32 << 20), 64 << 20))


# ----------------------------------------------------------------------------
# 2-D linear:  (M, K) @ (K, Np) + b
# ----------------------------------------------------------------------------
def _linear_2d(x2d, wt, bp, n_out):
    m, k = x2d.shape
    kw, n_pad = wt.shape
    assert kw == k, f"input_dim mismatch: x has {k}, weight has {kw}"

    x_bytes = x2d.dtype.itemsize
    w_bytes = wt.dtype.itemsize
    out_dtype = x2d.dtype

    # M tiling: no copy-padding of x. Small M -> one full-extent block; large
    # M -> 256-row tiles (full 256x256 MXU on v6e/v7x), ragged tail handled by
    # Pallas partial trailing block / masked writeback.
    tm = m if m <= 256 else 256

    weight_resident = (k * n_pad * w_bytes) <= (4 << 20)

    if weight_resident:
        # Whole W^T stays in VMEM; grid over M (and N only if very wide).
        tn = n_pad if n_pad <= 1024 else 1024
        grid = (pl.cdiv(m, tm), pl.cdiv(n_pad, tn))

        out = pl.pallas_call(
            _linear_resident_kernel,
            out_shape=jax.ShapeDtypeStruct((m, n_pad), out_dtype),
            grid_spec=pltpu.PrefetchScalarGridSpec(
                num_scalar_prefetch=0,
                grid=grid,
                in_specs=[
                    pl.BlockSpec((tm, k), lambda i, j: (i, 0)),   # x tile
                    pl.BlockSpec((k, tn), lambda i, j: (0, j)),   # W^T (resident)
                    pl.BlockSpec((1, tn), lambda i, j: (0, j)),   # bias
                ],
                out_specs=pl.BlockSpec((tm, tn), lambda i, j: (i, j)),
            ),
            compiler_params=pltpu.CompilerParams(
                dimension_semantics=("parallel", "parallel"),
                vmem_limit_bytes=_vmem_limit_bytes(
                    tm, tn, k, x_bytes, w_bytes, out_dtype.itemsize),
            ),
        )(x2d, wt, bp)
    else:
        # Rare path: weight too big to keep resident -> tile K as well.
        # K must be copy-padded here so the reduction never sees garbage.
        tn = min(512, n_pad)
        tk = min(512, _round_up(k, 128))
        k_pad = _round_up(k, tk)
        if k_pad != k:
            x2d = jnp.zeros((m, k_pad), x2d.dtype).at[:, :k].set(x2d)
            wt = jnp.zeros((k_pad, n_pad), wt.dtype).at[:k, :].set(wt)
        grid = (pl.cdiv(m, tm), pl.cdiv(n_pad, tn), k_pad // tk)

        out = pl.pallas_call(
            _linear_ktiled_kernel,
            out_shape=jax.ShapeDtypeStruct((m, n_pad), jnp.float32),
            grid_spec=pltpu.PrefetchScalarGridSpec(
                num_scalar_prefetch=0,
                grid=grid,
                in_specs=[
                    pl.BlockSpec((tm, tk), lambda i, j, kk: (i, kk)),
                    pl.BlockSpec((tk, tn), lambda i, j, kk: (kk, j)),
                    pl.BlockSpec((1, tn), lambda i, j, kk: (0, j)),
                ],
                out_specs=pl.BlockSpec((tm, tn), lambda i, j, kk: (i, j)),
            ),
            compiler_params=pltpu.CompilerParams(
                dimension_semantics=("parallel", "parallel", "arbitrary"),
                vmem_limit_bytes=_vmem_limit_bytes(
                    tm, tn, tk, x_bytes, w_bytes, 4),
            ),
        )(x2d, wt, bp)
        out = out.astype(out_dtype)

    return out[:, :n_out] if n_out != n_pad else out


# ----------------------------------------------------------------------------
# Module wrapper mirroring LINEAR_ENCODER.forward
# ----------------------------------------------------------------------------
def make_linear_encoder(w, b):
    """Prepare (transpose + pad) the weight once; return the forward fn."""
    wt, bp, n_out = prepare_linear_params(w, b)

    def forward(x):
        # torch: if len(input.shape) == 3: input = input.squeeze(1)
        if x.ndim == 3 and x.shape[1] == 1:
            x = jnp.squeeze(x, axis=1)
        lead = x.shape[:-1]
        k = x.shape[-1]
        y = _linear_2d(x.reshape((-1, k)), wt, bp, n_out)
        return y.reshape(lead + (n_out,))

    return forward


def linear_encoder(x, w, b):
    """Convenience one-shot call (prep not hoisted — prefer make_linear_encoder)."""
    return make_linear_encoder(w, b)(x)


if __name__ == "__main__":
    key = jax.random.PRNGKey(0)
    k_x, k_x3, k_w, k_b = jax.random.split(key, 4)

    # Small stand-ins for cfg.IMGF.input_dim / cfg.IMGF.embedding_dim.
    input_dim = 256
    embedding_dim = 128
    batch = 8

    x2d = jax.random.normal(k_x, (batch, input_dim), dtype=jnp.float32)
    # 3-D input exercises the squeeze(1) branch of forward().
    x3d = jax.random.normal(k_x3, (2, 1, input_dim), dtype=jnp.float32)

    # PyTorch Linear layout: W (out_features, in_features), b (out_features,).
    # init_trainable_weights uses uniform(-0.1, 0.1).
    w = jax.random.uniform(k_w, (embedding_dim, input_dim), dtype=jnp.float32,
                           minval=-0.1, maxval=0.1)
    b = 0.1 * jax.random.normal(k_b, (embedding_dim,), dtype=jnp.float32)

    encoder = make_linear_encoder(w, b)   # weight prep hoisted out of the hot path

    out2d = jax.block_until_ready(encoder(x2d))
    out3d = jax.block_until_ready(encoder(x3d))

    ref2d = x2d @ w.T + b
    ref3d = jnp.squeeze(x3d, axis=1) @ w.T + b

    assert out2d.shape == (batch, embedding_dim)
    assert out3d.shape == (2, embedding_dim)
    assert jnp.allclose(out2d, ref2d, atol=1e-5, rtol=1e-5)
    assert jnp.allclose(out3d, ref3d, atol=1e-5, rtol=1e-5)

    print("KERNEL_OK")
</pallas_src>

<mosaic_0001>
module attributes {stable_mosaic.version = 11 : i64} {
  func.func @_linear_resident_kernel(%arg0: i32, %arg1: i32, %arg2: memref<8x256xf32, #tpu.memory_space<vmem>>, %arg3: memref<256x128xf32, #tpu.memory_space<vmem>>, %arg4: memref<1x128xf32, #tpu.memory_space<vmem>>, %arg5: memref<8x128xf32, #tpu.memory_space<vmem>>) attributes {dimension_semantics = [#tpu.dimension_semantics<parallel>, #tpu.dimension_semantics<parallel>], iteration_bounds = array<i64: 1, 1>, scalar_prefetch = 0 : i64, scratch_operands = 0 : i64, tpu.core_type = #tpu.core_type<tc>, window_params = [{transform_indices = @transform_0, window_bounds = array<i64: 8, 256>}, {transform_indices = @transform_1, window_bounds = array<i64: 256, 128>}, {transform_indices = @transform_2, window_bounds = array<i64: 1, 128>}, {transform_indices = @transform_3, window_bounds = array<i64: 8, 128>}]} {
    %c0 = arith.constant 0 : index
    %c0_0 = arith.constant 0 : index
    %0 = vector.load %arg2[%c0, %c0_0] : memref<8x256xf32, #tpu.memory_space<vmem>>, vector<8x256xf32>
    %c0_1 = arith.constant 0 : index
    %c0_2 = arith.constant 0 : index
    %1 = vector.load %arg3[%c0_1, %c0_2] : memref<256x128xf32, #tpu.memory_space<vmem>>, vector<256x128xf32>
    %cst = arith.constant dense<0.000000e+00> : vector<8x128xf32>
    %2 = tpu.matmul %0, %1, %cst {dimension_numbers = #tpu.dot_dimension_numbers<[1], [0], [0], [1], [0, 0, 1, 1], [], []>} : vector<8x256xf32>, vector<256x128xf32>, vector<8x128xf32> -> vector<8x128xf32>
    %c0_3 = arith.constant 0 : index
    %c0_4 = arith.constant 0 : index
    %3 = vector.load %arg4[%c0_3, %c0_4] : memref<1x128xf32, #tpu.memory_space<vmem>>, vector<1x128xf32>
    %4 = vector.broadcast %3 : vector<1x128xf32> to vector<8x128xf32>
    %5 = arith.addf %2, %4 : vector<8x128xf32>
    %c0_5 = arith.constant 0 : index
    %c0_6 = arith.constant 0 : index
    %6 = vector.load %arg5[%c0_5, %c0_6] : memref<8x128xf32, #tpu.memory_space<vmem>>, vector<8x128xf32>
    tpu.vector_store %arg5[%c0_5, %c0_6], %5 {strides = array<i32>} : memref<8x128xf32, #tpu.memory_space<vmem>>, vector<8x128xf32>,
    return
  }
  func.func @transform_0(%arg0: i32, %arg1: i32) -> (i32, i32) {
    %c0_i32 = arith.constant 0 : i32
    %c0_i32_0 = arith.constant 0 : i32
    return %arg0, %c0_i32 : i32, i32
  }
  func.func @transform_1(%arg0: i32, %arg1: i32) -> (i32, i32) {
    %c0_i32 = arith.constant 0 : i32
    %c0_i32_0 = arith.constant 0 : i32
    return %c0_i32, %arg1 : i32, i32
  }
  func.func @transform_2(%arg0: i32, %arg1: i32) -> (i32, i32) {
    %c0_i32 = arith.constant 0 : i32
    %c0_i32_0 = arith.constant 0 : i32
    return %c0_i32, %arg1 : i32, i32
  }
  func.func @transform_3(%arg0: i32, %arg1: i32) -> (i32, i32) {
    %c0_i32 = arith.constant 0 : i32
    return %arg0, %arg1 : i32, i32
  }
}

</mosaic_0001>

<llo_original>
// kernel: tpu_custom_call.1
$region0: #{tpu_custom_call.1}
  #allocation0 [shape = 'u32[]', space=smem, size = 0x4, offset = 0x4, fixed_abs, tag = 'smem constant byte address 0x4 - core index']
  #allocation1 [shape = 'u32[72,128]{1,0:T(1,128)}', space=vmem, size = 0x9000, scoped, tag = 'internal scratch']
  %s0 = inlined_call_operand.hbm [shape: f32[8,256], index: 0, kind: input, shape index: {}]
  %s1 = inlined_call_operand.hbm [shape: f32[256,128], index: 1, kind: input, shape index: {}]
  %s2 = inlined_call_operand.vmem [shape: f32[1,128], index: 2, kind: input, shape index: {}]
  %s3 = inlined_call_operand.hbm [shape: f32[8,128], index: 3, kind: output, shape index: {}]
  %s4 = sld [smem:[#allocation0]]
  $region30: #{tpu_custom_call.1} parent=0
    _
  %s6 = ssub.s32 1, %s4
  %s7 = scalar_select 0, %s6, %s4
  $region1: #{tpu_custom_call.1} parent=0
    #allocation2 [shape = 'u8[8192]{0}', space=vmem, size = 0x2000, scoped, tag = 'input window, operand 0, single buffered']
    #allocation3 [shape = 's32[1]{0}', space=sflag, size = 0x4, scoped, tag = 'scoped memory for tpu_custom_call.1']
    #allocation4 [shape = 's32[1]{0}', space=sflag, size = 0x4, scoped, tag = 'scoped memory for tpu_custom_call.1']
    #allocation5 [shape = 'u8[131072]{0}', space=vmem, size = 0x20000, scoped, tag = 'input window, operand 1, single buffered']
    #allocation6 [shape = 's32[1]{0}', space=sflag, size = 0x4, scoped, tag = 'scoped memory for tpu_custom_call.1']
    #allocation7 [shape = 'u8[4096]{0}', space=vmem, size = 0x1000, scoped, tag = 'output window, operand 0, single buffered']
    %8 = vsyncpa [#allocation3], 0
    %9 = vsyncpa [#allocation6], 0
    %10 = vsyncpa [#allocation4], 0
    // Predicated region
    $region2: #{tpu_custom_call.1} parent=1 // pred_check
      _
    $region3: #{tpu_custom_call.1} parent=1 // pred_check_branch
      %12 = sbr.rel (0) target = $region5
    $region4: #{tpu_custom_call.1} parent=1 // pred_region
      %14 = vsyncadd [#allocation3], 0
      %s16 = sshll.u32 %s0, 4
      %s17 = int_to_ptr.hbm [resolvable:$true] %s16
      %s18 = sshll.u32 [#allocation2], 4
      %s19 = int_to_ptr.vmem [resolvable:$true] %s18
      %21 = dma.hbm_to_vmem [thread:$0]  %s17, 256, %s19, [#allocation3]
    $region5: #{tpu_custom_call.1} parent=1 // pred_fallthru
      _
    // Predicated region
    $region6: #{tpu_custom_call.1} parent=1 // pred_check
      _
    $region7: #{tpu_custom_call.1} parent=1 // pred_check_branch
      %23 = sbr.rel (0) target = $region9
    $region8: #{tpu_custom_call.1} parent=1 // pred_region
      %25 = vsyncadd [#allocation6], 0
      %s26 = sshll.u32 %s1, 4
      %s27 = int_to_ptr.hbm [resolvable:$true] %s26
      %s28 = sshll.u32 [#allocation5], 4
      %s29 = int_to_ptr.vmem [resolvable:$true] %s28
      %34 = dma.hbm_to_vmem [thread:$0]  %s27, 4096, %s29, [#allocation6], 128, 128, 8
    $region9: #{tpu_custom_call.1} parent=1 // pred_fallthru
      _
    // Predicated region
    $region10: #{tpu_custom_call.1} parent=1 // pred_check
      _
    $region11: #{tpu_custom_call.1} parent=1 // pred_check_branch
      %36 = sbr.rel (0) target = $region13
    $region12: #{tpu_custom_call.1} parent=1 // pred_region
      _
    $region13: #{tpu_custom_call.1} parent=1 // pred_fallthru
      _
    // Predicated region
    $region14: #{tpu_custom_call.1} parent=1 // pred_check
      _
    $region15: #{tpu_custom_call.1} parent=1 // pred_check_branch
      %38 = sbr.rel (0) target = $region17
    $region16: #{tpu_custom_call.1} parent=1 // pred_region
      %40 = dma.done [#allocation3], 256
    $region17: #{tpu_custom_call.1} parent=1 // pred_fallthru
      _
    // Predicated region
    $region18: #{tpu_custom_call.1} parent=1 // pred_check
      _
    $region19: #{tpu_custom_call.1} parent=1 // pred_check_branch
      %42 = sbr.rel (0) target = $region21
    $region20: #{tpu_custom_call.1} parent=1 // pred_region
      %44 = dma.done [#allocation6], 4096
    $region21: #{tpu_custom_call.1} parent=1 // pred_fallthru
      _
    %v45 = vld [vmem:[#allocation2] sm:$0xff]
    %v46 = vld [vmem:[#allocation2 + $0x8] sm:$0xff]
    %v47 = vld [vmem:[#allocation5] sm:$0xff]
    %v48 = vld [vmem:[#allocation5 + $0x8] sm:$0xff]
    %v49 = vld [vmem:[#allocation5 + $0x10] sm:$0xff]
    %v50 = vld [vmem:[#allocation5 + $0x18] sm:$0xff]
    %v51 = vld [vmem:[#allocation5 + $0x20] sm:$0xff]
    %v52 = vld [vmem:[#allocation5 + $0x28] sm:$0xff]
    %v53 = vld [vmem:[#allocation5 + $0x30] sm:$0xff]
    %v54 = vld [vmem:[#allocation5 + $0x38] sm:$0xff]
    %v55 = vld [vmem:[#allocation5 + $0x40] sm:$0xff]
    %v56 = vld [vmem:[#allocation5 + $0x48] sm:$0xff]
    %v57 = vld [vmem:[#allocation5 + $0x50] sm:$0xff]
    %v58 = vld [vmem:[#allocation5 + $0x58] sm:$0xff]
    %v59 = vld [vmem:[#allocation5 + $0x60] sm:$0xff]
    %v60 = vld [vmem:[#allocation5 + $0x68] sm:$0xff]
    %v61 = vld [vmem:[#allocation5 + $0x70] sm:$0xff]
    %v62 = vld [vmem:[#allocation5 + $0x78] sm:$0xff]
    %v63 = vld [vmem:[#allocation5 + $0x80] sm:$0xff]
    %v64 = vld [vmem:[#allocation5 + $0x88] sm:$0xff]
    %v65 = vld [vmem:[#allocation5 + $0x90] sm:$0xff]
    %v66 = vld [vmem:[#allocation5 + $0x98] sm:$0xff]
    %v67 = vld [vmem:[#allocation5 + $0xa0] sm:$0xff]
    %v68 = vld [vmem:[#allocation5 + $0xa8] sm:$0xff]
    %v69 = vld [vmem:[#allocation5 + $0xb0] sm:$0xff]
    %v70 = vld [vmem:[#allocation5 + $0xb8] sm:$0xff]
    %v71 = vld [vmem:[#allocation5 + $0xc0] sm:$0xff]
    %v72 = vld [vmem:[#allocation5 + $0xc8] sm:$0xff]
    %v73 = vld [vmem:[#allocation5 + $0xd0] sm:$0xff]
    %v74 = vld [vmem:[#allocation5 + $0xd8] sm:$0xff]
    %v75 = vld [vmem:[#allocation5 + $0xe0] sm:$0xff]
    %v76 = vld [vmem:[#allocation5 + $0xe8] sm:$0xff]
    %v77 = vld [vmem:[#allocation5 + $0xf0] sm:$0xff]
    %v78 = vld [vmem:[#allocation5 + $0xf8] sm:$0xff]
    %v79 = vld [vmem:[%s2] sm:$0x1]
    %v81 = vperm.slane %v79, 0
    %83 = vmatpush.msra.mxu0 %v62
    %84 = vmatpush.msra.mxu0 %v61
    %85 = vmatpush.msra.mxu0 %v60
    %86 = vmatpush.msra.mxu0 %v59
    %87 = vmatpush.msra.mxu0 %v58
    %88 = vmatpush.msra.mxu0 %v57
    %89 = vmatpush.msra.mxu0 %v56
    %90 = vmatpush.msra.mxu0 %v55
    %91 = vmatpush.msra.mxu0 %v54
    %92 = vmatpush.msra.mxu0 %v53
    %93 = vmatpush.msra.mxu0 %v52
    %94 = vmatpush.msra.mxu0 %v51
    %95 = vmatpush.msra.mxu0 %v50
    %96 = vmatpush.msra.mxu0 %v49
    %97 = vmatpush.msra.mxu0 %v48
    %98 = vmatpush.msra.mxu0 %v47
    %99 = vmatmul.f32.gmra.mxu0 %v45
    %v100 = vpop.f32.mrf.mxu0
    %v101 = vadd.f32 %v81, %v100
    %102 = vdwg.mxu0
    %103 = vmatpush.msra.mxu0 %v78
    %104 = vmatpush.msra.mxu0 %v77
    %105 = vmatpush.msra.mxu0 %v76
    %106 = vmatpush.msra.mxu0 %v75
    %107 = vmatpush.msra.mxu0 %v74
    %108 = vmatpush.msra.mxu0 %v73
    %109 = vmatpush.msra.mxu0 %v72
    %110 = vmatpush.msra.mxu0 %v71
    %111 = vmatpush.msra.mxu0 %v70
    %112 = vmatpush.msra.mxu0 %v69
    %113 = vmatpush.msra.mxu0 %v68
    %114 = vmatpush.msra.mxu0 %v67
    %115 = vmatpush.msra.mxu0 %v66
    %116 = vmatpush.msra.mxu0 %v65
    %117 = vmatpush.msra.mxu0 %v64
    %118 = vmatpush.msra.mxu0 %v63
    %119 = vmatmul.f32.gmra.mxu0 %v46
    %v120 = vpop.f32.mrf.mxu0
    %v121 = vadd.f32 %v101, %v120
    %122 = vdwg.mxu0
    %123 = vst [vmem:[#allocation7] sm:$0xff] %v121
    // Predicated region
    $region22: #{tpu_custom_call.1} parent=1 // pred_check
      _
    $region23: #{tpu_custom_call.1} parent=1 // pred_check_branch
      %125 = sbr.rel (0) target = $region25
    $region24: #{tpu_custom_call.1} parent=1 // pred_region
      %127 = vsyncadd [#allocation4], 0
      %s129 = sshll.u32 [#allocation7], 4
      %s130 = int_to_ptr.vmem [resolvable:$true] %s129
      %s131 = sshll.u32 %s3, 4
      %s132 = int_to_ptr.hbm [resolvable:$true] %s131
      %134 = dma.vmem_to_hbm [thread:$0]  %s130, 128, %s132, [#allocation4]
    $region25: #{tpu_custom_call.1} parent=1 // pred_fallthru
      _
    // Predicated region
    $region26: #{tpu_custom_call.1} parent=1 // pred_check
      _
    $region27: #{tpu_custom_call.1} parent=1 // pred_check_branch
      %136 = sbr.rel (0) target = $region29
    $region28: #{tpu_custom_call.1} parent=1 // pred_region
      %138 = dma.done [#allocation4], 128
    $region29: #{tpu_custom_call.1} parent=1 // pred_fallthru
      _
    %139 = vsyncpa [#allocation3], 1
    %140 = vsyncpa [#allocation6], 1
    %141 = vsyncpa [#allocation4], 1

</llo_original>
